<compile_context>
chip_gen: v7x
topology: tpu7x:2x2x1
jax: 0.10.0
libtpu: 0.0.40
codegen_flags: <defaults>
</compile_context>

<pallas_src>
import functools

import jax
import jax.numpy as jnp
import numpy as np
from jax.experimental import pallas as pl
from jax.experimental.pallas import tpu as pltpu

# Real module: Conv2d(2049 -> 4097, 5x5, pad=2) then Conv2d(4097 -> 4097, 5x5, pad=2).
# The smoke test below runs the identical structure at small channel counts;
# channel count only changes the matmul K/N extents, not the kernel logic.

TK_MAX = 4096      # K-tile ceiling  (bf16 weight tile <= 4 MiB)
TN_MAX = 512       # Cout-tile ceiling
TM_MAX = 256       # pooled-pixel tile ceiling (2*tm = 512 MXU rows per step)


def _round_up(x, m):
    return ((x + m - 1) // m) * m


def _tiles(dim, tmax):
    """Tile size t (<= tmax, multiple of 128) and padded extent (multiple of t)."""
    base = _round_up(dim, 128)
    t = tmax if base >= tmax else base
    return t, _round_up(dim, t)


def _layer_pads(cin, cout):
    """(tk, Kpad, tn, Npad) for a 5x5 conv layer cin -> cout."""
    tk, kpad = _tiles(25 * cin, TK_MAX)
    tn, npad = _tiles(cout, TN_MAX)
    return tk, kpad, tn, npad


def _m_tile(m):
    """(tm, Mpad) for the pooled-pixel dimension (multiples of 16 for bf16 tiling)."""
    base = _round_up(m, 16)
    tm = TM_MAX if base >= TM_MAX else base
    return tm, _round_up(m, tm)


def _vmem_limit_bytes():
    """Generation-aware scoped-VMEM limit (~51 MiB on v7x, ~100 MiB on v5e/v6e)."""
    phys = 64 * 1024 * 1024
    try:
        info = pltpu.get_tpu_info()
        phys = int(getattr(info, "vmem_capacity_bytes", phys))
    except Exception:
        pass
    return max(32 * 1024 * 1024, min(phys * 4 // 5, 112 * 1024 * 1024))


def _fused_conv_kernel(a_ref, w_ref, bias_ref, o_ref, acc_ref, *, tm):
    """Grid step (i, j, k):
         acc <- / += A[i,k-tile] @ W[k-tile, j-tile]
       On the last K step: bias + width-2 max-pool (row-block max) + ReLU."""
    k = pl.program_id(2)

    c = jnp.dot(a_ref[...], w_ref[...], preferred_element_type=jnp.float32)

    @pl.when(k == 0)
    def _():
        acc_ref[...] = c

    @pl.when(k > 0)
    def _():
        acc_ref[...] += c

    @pl.when(k == pl.num_programs(2) - 1)
    def _():
        # maxpool(relu(z + bias)) == relu(max(z_even, z_odd) + bias)
        z = jnp.maximum(acc_ref[:tm, :], acc_ref[tm:, :]) + bias_ref[...]
        o_ref[...] = jnp.maximum(z, 0.0).astype(o_ref.dtype)


def _im2col_5x5_same(x_nhwc):
    """x: (N,H,W,C) -> (N,H,W,25*C); 5x5 kernel, padding=2, stride=1, (kh,kw,cin) order."""
    N, H, W, C = x_nhwc.shape
    xp = jnp.pad(x_nhwc, ((0, 0), (2, 2), (2, 2), (0, 0)))
    cols = [xp[:, i:i + H, j:j + W, :] for i in range(5) for j in range(5)]
    return jnp.concatenate(cols, axis=-1)


def conv_relu_maxpool_pallas(x_nhwc, w_tiled, bias_pad, cout, out_dtype=jnp.float32):
    """Conv2d(5x5, pad=2, stride=1) + ReLU + MaxPool2d((1,2)) in one pallas_call.

    x_nhwc:   (N, H, W, Cin) f32 or bf16
    w_tiled:  (Kpad//tk, Npad//tn, tk, tn) bf16, pre-tiled flattened (kh,kw,cin)->cout
              weights; padded rows/cols are zero.
    bias_pad: (1, Npad) f32, padded cols zero.
    returns:  (N, H, W // 2, cout) out_dtype
    """
    N, H, W, Cin = x_nhwc.shape
    assert W % 2 == 0
    K = 25 * Cin
    tk, Kpad, tn, Npad = _layer_pads(Cin, cout)
    Kt, Nt = Kpad // tk, Npad // tn
    assert w_tiled.shape == (Kt, Nt, tk, tn), (w_tiled.shape, (Kt, Nt, tk, tn))
    assert bias_pad.shape == (1, Npad)

    m = N * H * (W // 2)                       # pooled output pixels
    tm, Mpad = _m_tile(m)
    Mt = Mpad // tm

    patches = _im2col_5x5_same(x_nhwc)                                   # (N,H,W,K)
    patches = jnp.pad(patches, ((0, 0), (0, 0), (0, 0), (0, Kpad - K)))
    a_even = patches[:, :, 0::2, :].reshape(m, Kpad)
    a_odd = patches[:, :, 1::2, :].reshape(m, Kpad)
    if Mpad != m:
        a_even = jnp.pad(a_even, ((0, Mpad - m), (0, 0)))
        a_odd = jnp.pad(a_odd, ((0, Mpad - m), (0, 0)))
    # Interleave per M-tile: rows [even tile i ; odd tile i], so one block index
    # (i, k) fetches both pooling operands as a single (2*tm, tk) block.
    a = jnp.stack([a_even.reshape(Mt, tm, Kpad),
                   a_odd.reshape(Mt, tm, Kpad)], axis=1)                 # (Mt,2,tm,Kpad)
    a = a.reshape(Mt * 2 * tm, Kpad).astype(jnp.bfloat16)

    grid = (Mt, Nt, Kt)                       # (M tiles, Cout tiles, K tiles)
    kernel = functools.partial(_fused_conv_kernel, tm=tm)

    out = pl.pallas_call(
        kernel,
        out_shape=jax.ShapeDtypeStruct((Mpad, Npad), out_dtype),
        grid_spec=pltpu.PrefetchScalarGridSpec(
            num_scalar_prefetch=0,
            grid=grid,
            in_specs=[
                # im2col block: streamed (2*tm, tk) per step -> no VMEM-residency cliff.
                pl.BlockSpec((2 * tm, tk), lambda i, j, k: (i, k)),
                # pre-tiled weights: one contiguous (tk, tn) bf16 DMA per step.
                pl.BlockSpec((None, None, tk, tn), lambda i, j, k: (k, j, 0, 0)),
                # bias: tiny, re-fetched only when j changes.
                pl.BlockSpec((1, tn), lambda i, j, k: (0, j)),
            ],
            out_specs=pl.BlockSpec((tm, tn), lambda i, j, k: (i, j)),
            scratch_shapes=[pltpu.VMEM((2 * tm, tn), jnp.float32)],
        ),
        compiler_params=pltpu.CompilerParams(
            dimension_semantics=("parallel", "parallel", "arbitrary"),
            vmem_limit_bytes=_vmem_limit_bytes(),
        ),
    )(a, w_tiled, bias_pad)

    return out[:m, :cout].reshape(N, H, W // 2, cout)


def convnet_forward(x_nchw, params, cout1, cout2):
    assert x_nchw.shape[3] % 4 == 0, "input W must be a multiple of 4 (two width-2 pools)"
    x = jnp.transpose(x_nchw, (0, 2, 3, 1))                  # NCHW -> NHWC
    # Layer-1 output kept in bf16 (layer 2 casts to bf16 anyway) -> half the
    # inter-layer HBM traffic; final layer output is f32.
    y = conv_relu_maxpool_pallas(x, params["w1"], params["b1"], cout1,
                                 out_dtype=jnp.bfloat16)
    y = conv_relu_maxpool_pallas(y, params["w2"], params["b2"], cout2,
                                 out_dtype=jnp.float32)
    return jnp.transpose(y, (0, 3, 1, 2))                    # NHWC -> NCHW


def _untile_weight(w_tiled):
    """(Kt, Nt, tk, tn) -> (Kpad, Npad) flat matmul weight (for the reference)."""
    Kt, Nt, tk, tn = w_tiled.shape
    return jnp.transpose(w_tiled, (0, 2, 1, 3)).reshape(Kt * tk, Nt * tn)


def init_params(key, cin1, cout1, cout2):
    """Deterministic synthetic weights, directly in the pre-tiled matmul layout.

    Layout: flattened (kh, kw, cin) -> cout (PyTorch Conv2d weight would map via
    weight.permute(2, 3, 1, 0).reshape(25*cin, cout)); padded rows/cols are zero;
    weights bf16, bias f32.
    """
    k1, k2, k3, k4 = jax.random.split(key, 4)

    def make_layer(kw_key, kb_key, cin, cout):
        tk, kpad, tn, npad = _layer_pads(cin, cout)
        K = 25 * cin
        s = 1.0 / np.sqrt(K)
        w = jax.random.normal(kw_key, (K, cout), jnp.float32) * s
        w_full = jnp.zeros((kpad, npad), jnp.float32).at[:K, :cout].set(w)
        # Pre-tile so each grid step's weight tile is a contiguous HBM block.
        w_tiled = w_full.reshape(kpad // tk, tk, npad // tn, tn).transpose(0, 2, 1, 3)
        b = jax.random.normal(kb_key, (cout,), jnp.float32) * s
        b_pad = jnp.zeros((1, npad), jnp.float32).at[0, :cout].set(b)
        return w_tiled.astype(jnp.bfloat16), b_pad

    w1, b1 = make_layer(k1, k2, cin1, cout1)
    w2, b2 = make_layer(k3, k4, cout1, cout2)
    return {"w1": w1, "b1": b1, "w2": w2, "b2": b2}


def _ref_block(x_nhwc, w_tiled, bias_pad, cout, out_dtype):
    """Plain-XLA reference for conv + relu + maxpool(1,2) with the same bf16 rounding."""
    N, H, W, Cin = x_nhwc.shape
    K = 25 * Cin
    patches = _im2col_5x5_same(x_nhwc).reshape(N * H * W, K)
    patches = patches.astype(jnp.bfloat16).astype(jnp.float32)    # match kernel rounding
    w = _untile_weight(w_tiled)[:K, :cout].astype(jnp.float32)
    z = patches @ w + bias_pad[0, :cout]
    z = jnp.maximum(z, 0.0).reshape(N, H, W, cout)
    y = jnp.max(z.reshape(N, H, W // 2, 2, cout), axis=3)
    return y.astype(out_dtype)


if __name__ == "__main__":
    key = jax.random.PRNGKey(0)
    pkey, xkey = jax.random.split(key)

    # Small, fast smoke-test shapes with the exact module structure
    # (Conv2d 5x5 pad=2 -> ReLU -> MaxPool(1,2)) x 2. The real module uses
    # 2049 -> 4097 -> 4097 channels; that only scales the matmul K/N extents.
    CIN1, COUT1, COUT2 = 8, 16, 16
    N, H, W = 2, 4, 16

    params = init_params(pkey, CIN1, COUT1, COUT2)
    x = jax.random.normal(xkey, (N, CIN1, H, W), jnp.float32)    # NCHW

    fwd = jax.jit(convnet_forward, static_argnums=(2, 3))
    out = jax.block_until_ready(fwd(x, params, COUT1, COUT2))

    assert out.shape == (N, COUT2, H, W // 4), out.shape
    assert bool(jnp.all(jnp.isfinite(out)))

    # Numerical check against a plain-XLA reference using the same weights.
    xh = jnp.transpose(x, (0, 2, 3, 1))
    ref = _ref_block(xh, params["w1"], params["b1"], COUT1, jnp.bfloat16)
    ref = _ref_block(ref, params["w2"], params["b2"], COUT2, jnp.float32)
    ref = jnp.transpose(ref, (0, 3, 1, 2))
    np.testing.assert_allclose(np.asarray(out), np.asarray(ref),
                               rtol=2e-2, atol=2e-2)

    print("KERNEL_OK")
</pallas_src>

<mosaic_0001>
module attributes {stable_mosaic.version = 11 : i64} {
  func.func @_fused_conv_kernel(%arg0: i32, %arg1: i32, %arg2: i32, %arg3: memref<128x256xbf16, #tpu.memory_space<vmem>>, %arg4: memref<1x1x256x128xbf16, #tpu.memory_space<vmem>>, %arg5: memref<1x128xf32, #tpu.memory_space<vmem>>, %arg6: memref<64x128xbf16, #tpu.memory_space<vmem>>, %arg7: memref<128x128xf32, #tpu.memory_space<vmem>>) attributes {dimension_semantics = [#tpu.dimension_semantics<parallel>, #tpu.dimension_semantics<parallel>, #tpu.dimension_semantics<arbitrary>], iteration_bounds = array<i64: 1, 1, 1>, scalar_prefetch = 0 : i64, scratch_operands = 1 : i64, tpu.core_type = #tpu.core_type<tc>, window_params = [{transform_indices = @transform_0, window_bounds = array<i64: 128, 256>}, {transform_indices = @transform_1, window_bounds = array<i64: 1, 1, 256, 128>}, {transform_indices = @transform_2, window_bounds = array<i64: 1, 128>}, {transform_indices = @transform_3, window_bounds = array<i64: 64, 128>}]} {
    %c0 = arith.constant 0 : index
    %c0_0 = arith.constant 0 : index
    %0 = vector.load %arg3[%c0, %c0_0] : memref<128x256xbf16, #tpu.memory_space<vmem>>, vector<128x256xbf16>
    %c0_1 = arith.constant 0 : index
    %c0_2 = arith.constant 0 : index
    %c0_3 = arith.constant 0 : index
    %c0_4 = arith.constant 0 : index
    %1 = vector.load %arg4[%c0_1, %c0_2, %c0_3, %c0_4] : memref<1x1x256x128xbf16, #tpu.memory_space<vmem>>, vector<1x1x256x128xbf16>
    %2 = vector.shape_cast %1 : vector<1x1x256x128xbf16> to vector<256x128xbf16>
    %cst = arith.constant dense<0.000000e+00> : vector<128x128xf32>
    %3 = tpu.matmul %0, %2, %cst {dimension_numbers = #tpu.dot_dimension_numbers<[1], [0], [0], [1], [0, 0, 1, 1], [], []>} : vector<128x256xbf16>, vector<256x128xbf16>, vector<128x128xf32> -> vector<128x128xf32>
    %c0_i32 = arith.constant 0 : i32
    %4 = arith.cmpi eq, %arg2, %c0_i32 : i32
    %5 = arith.extui %4 : i1 to i32
    %c0_i32_5 = arith.constant 0 : i32
    %6 = arith.cmpi ne, %5, %c0_i32_5 : i32
    scf.if %6 {
      %c0_10 = arith.constant 0 : index
      %c0_11 = arith.constant 0 : index
      %13 = vector.load %arg7[%c0_10, %c0_11] : memref<128x128xf32, #tpu.memory_space<vmem>>, vector<128x128xf32>
      tpu.vector_store %arg7[%c0_10, %c0_11], %3 {strides = array<i32>} : memref<128x128xf32, #tpu.memory_space<vmem>>, vector<128x128xf32>,
    } else {
    }
    %c0_i32_6 = arith.constant 0 : i32
    %7 = arith.cmpi sgt, %arg2, %c0_i32_6 : i32
    %8 = arith.extui %7 : i1 to i32
    %c0_i32_7 = arith.constant 0 : i32
    %9 = arith.cmpi ne, %8, %c0_i32_7 : i32
    scf.if %9 {
      %c0_10 = arith.constant 0 : index
      %c0_11 = arith.constant 0 : index
      %13 = vector.load %arg7[%c0_10, %c0_11] : memref<128x128xf32, #tpu.memory_space<vmem>>, vector<128x128xf32>
      %14 = arith.addf %13, %3 : vector<128x128xf32>
      %c0_12 = arith.constant 0 : index
      %c0_13 = arith.constant 0 : index
      %15 = vector.load %arg7[%c0_12, %c0_13] : memref<128x128xf32, #tpu.memory_space<vmem>>, vector<128x128xf32>
      tpu.vector_store %arg7[%c0_12, %c0_13], %14 {strides = array<i32>} : memref<128x128xf32, #tpu.memory_space<vmem>>, vector<128x128xf32>,
    } else {
    }
    %c0_i32_8 = arith.constant 0 : i32
    %10 = arith.cmpi eq, %arg2, %c0_i32_8 : i32
    %11 = arith.extui %10 : i1 to i32
    %c0_i32_9 = arith.constant 0 : i32
    %12 = arith.cmpi ne, %11, %c0_i32_9 : i32
    scf.if %12 {
      %c0_10 = arith.constant 0 : index
      %c0_11 = arith.constant 0 : index
      %13 = vector.load %arg7[%c0_10, %c0_11] : memref<128x128xf32, #tpu.memory_space<vmem>>, vector<64x128xf32>
      %c64 = arith.constant 64 : index
      %c0_12 = arith.constant 0 : index
      %14 = vector.load %arg7[%c64, %c0_12] : memref<128x128xf32, #tpu.memory_space<vmem>>, vector<64x128xf32>
      %15 = arith.maximumf %13, %14 : vector<64x128xf32>
      %c0_13 = arith.constant 0 : index
      %c0_14 = arith.constant 0 : index
      %16 = vector.load %arg5[%c0_13, %c0_14] : memref<1x128xf32, #tpu.memory_space<vmem>>, vector<1x128xf32>
      %17 = vector.broadcast %16 : vector<1x128xf32> to vector<64x128xf32>
      %18 = arith.addf %15, %17 : vector<64x128xf32>
      %cst_15 = arith.constant 0.000000e+00 : f32
      %19 = vector.broadcast %cst_15 : f32 to vector<64x128xf32>
      %20 = arith.maximumf %18, %19 : vector<64x128xf32>
      %21 = arith.truncf %20 : vector<64x128xf32> to vector<64x128xbf16>
      %c0_16 = arith.constant 0 : index
      %c0_17 = arith.constant 0 : index
      %22 = vector.load %arg6[%c0_16, %c0_17] : memref<64x128xbf16, #tpu.memory_space<vmem>>, vector<64x128xbf16>
      tpu.vector_store %arg6[%c0_16, %c0_17], %21 {strides = array<i32>} : memref<64x128xbf16, #tpu.memory_space<vmem>>, vector<64x128xbf16>,
    } else {
    }
    return
  }
  func.func @transform_0(%arg0: i32, %arg1: i32, %arg2: i32) -> (i32, i32) {
    %c0_i32 = arith.constant 0 : i32
    return %arg0, %arg2 : i32, i32
  }
  func.func @transform_1(%arg0: i32, %arg1: i32, %arg2: i32) -> (i32, i32, i32, i32) {
    %c0_i32 = arith.constant 0 : i32
    %c0_i32_0 = arith.constant 0 : i32
    %c0_i32_1 = arith.constant 0 : i32
    return %arg2, %arg1, %c0_i32, %c0_i32_0 : i32, i32, i32, i32
  }
  func.func @transform_2(%arg0: i32, %arg1: i32, %arg2: i32) -> (i32, i32) {
    %c0_i32 = arith.constant 0 : i32
    %c0_i32_0 = arith.constant 0 : i32
    return %c0_i32, %arg1 : i32, i32
  }
  func.func @transform_3(%arg0: i32, %arg1: i32, %arg2: i32) -> (i32, i32) {
    %c0_i32 = arith.constant 0 : i32
    return %arg0, %arg1 : i32, i32
  }
}

module attributes {stable_mosaic.version = 11 : i64} {
  func.func @_fused_conv_kernel(%arg0: i32, %arg1: i32, %arg2: i32, %arg3: memref<64x512xbf16, #tpu.memory_space<vmem>>, %arg4: memref<1x1x512x128xbf16, #tpu.memory_space<vmem>>, %arg5: memref<1x128xf32, #tpu.memory_space<vmem>>, %arg6: memref<32x128xf32, #tpu.memory_space<vmem>>, %arg7: memref<64x128xf32, #tpu.memory_space<vmem>>) attributes {dimension_semantics = [#tpu.dimension_semantics<parallel>, #tpu.dimension_semantics<parallel>, #tpu.dimension_semantics<arbitrary>], iteration_bounds = array<i64: 1, 1, 1>, scalar_prefetch = 0 : i64, scratch_operands = 1 : i64, tpu.core_type = #tpu.core_type<tc>, window_params = [{transform_indices = @transform_0, window_bounds = array<i64: 64, 512>}, {transform_indices = @transform_1, window_bounds = array<i64: 1, 1, 512, 128>}, {transform_indices = @transform_2, window_bounds = array<i64: 1, 128>}, {transform_indices = @transform_3, window_bounds = array<i64: 32, 128>}]} {
    %c0 = arith.constant 0 : index
    %c0_0 = arith.constant 0 : index
    %0 = vector.load %arg3[%c0, %c0_0] : memref<64x512xbf16, #tpu.memory_space<vmem>>, vector<64x512xbf16>
    %c0_1 = arith.constant 0 : index
    %c0_2 = arith.constant 0 : index
    %c0_3 = arith.constant 0 : index
    %c0_4 = arith.constant 0 : index
    %1 = vector.load %arg4[%c0_1, %c0_2, %c0_3, %c0_4] : memref<1x1x512x128xbf16, #tpu.memory_space<vmem>>, vector<1x1x512x128xbf16>
    %2 = vector.shape_cast %1 : vector<1x1x512x128xbf16> to vector<512x128xbf16>
    %cst = arith.constant dense<0.000000e+00> : vector<64x128xf32>
    %3 = tpu.matmul %0, %2, %cst {dimension_numbers = #tpu.dot_dimension_numbers<[1], [0], [0], [1], [0, 0, 1, 1], [], []>} : vector<64x512xbf16>, vector<512x128xbf16>, vector<64x128xf32> -> vector<64x128xf32>
    %c0_i32 = arith.constant 0 : i32
    %4 = arith.cmpi eq, %arg2, %c0_i32 : i32
    %5 = arith.extui %4 : i1 to i32
    %c0_i32_5 = arith.constant 0 : i32
    %6 = arith.cmpi ne, %5, %c0_i32_5 : i32
    scf.if %6 {
      %c0_10 = arith.constant 0 : index
      %c0_11 = arith.constant 0 : index
      %13 = vector.load %arg7[%c0_10, %c0_11] : memref<64x128xf32, #tpu.memory_space<vmem>>, vector<64x128xf32>
      tpu.vector_store %arg7[%c0_10, %c0_11], %3 {strides = array<i32>} : memref<64x128xf32, #tpu.memory_space<vmem>>, vector<64x128xf32>,
    } else {
    }
    %c0_i32_6 = arith.constant 0 : i32
    %7 = arith.cmpi sgt, %arg2, %c0_i32_6 : i32
    %8 = arith.extui %7 : i1 to i32
    %c0_i32_7 = arith.constant 0 : i32
    %9 = arith.cmpi ne, %8, %c0_i32_7 : i32
    scf.if %9 {
      %c0_10 = arith.constant 0 : index
      %c0_11 = arith.constant 0 : index
      %13 = vector.load %arg7[%c0_10, %c0_11] : memref<64x128xf32, #tpu.memory_space<vmem>>, vector<64x128xf32>
      %14 = arith.addf %13, %3 : vector<64x128xf32>
      %c0_12 = arith.constant 0 : index
      %c0_13 = arith.constant 0 : index
      %15 = vector.load %arg7[%c0_12, %c0_13] : memref<64x128xf32, #tpu.memory_space<vmem>>, vector<64x128xf32>
      tpu.vector_store %arg7[%c0_12, %c0_13], %14 {strides = array<i32>} : memref<64x128xf32, #tpu.memory_space<vmem>>, vector<64x128xf32>,
    } else {
    }
    %c0_i32_8 = arith.constant 0 : i32
    %10 = arith.cmpi eq, %arg2, %c0_i32_8 : i32
    %11 = arith.extui %10 : i1 to i32
    %c0_i32_9 = arith.constant 0 : i32
    %12 = arith.cmpi ne, %11, %c0_i32_9 : i32
    scf.if %12 {
      %c0_10 = arith.constant 0 : index
      %c0_11 = arith.constant 0 : index
      %13 = vector.load %arg7[%c0_10, %c0_11] : memref<64x128xf32, #tpu.memory_space<vmem>>, vector<32x128xf32>
      %c32 = arith.constant 32 : index
      %c0_12 = arith.constant 0 : index
      %14 = vector.load %arg7[%c32, %c0_12] : memref<64x128xf32, #tpu.memory_space<vmem>>, vector<32x128xf32>
      %15 = arith.maximumf %13, %14 : vector<32x128xf32>
      %c0_13 = arith.constant 0 : index
      %c0_14 = arith.constant 0 : index
      %16 = vector.load %arg5[%c0_13, %c0_14] : memref<1x128xf32, #tpu.memory_space<vmem>>, vector<1x128xf32>
      %17 = vector.broadcast %16 : vector<1x128xf32> to vector<32x128xf32>
      %18 = arith.addf %15, %17 : vector<32x128xf32>
      %cst_15 = arith.constant 0.000000e+00 : f32
      %19 = vector.broadcast %cst_15 : f32 to vector<32x128xf32>
      %20 = arith.maximumf %18, %19 : vector<32x128xf32>
      %c0_16 = arith.constant 0 : index
      %c0_17 = arith.constant 0 : index
      %21 = vector.load %arg6[%c0_16, %c0_17] : memref<32x128xf32, #tpu.memory_space<vmem>>, vector<32x128xf32>
      tpu.vector_store %arg6[%c0_16, %c0_17], %20 {strides = array<i32>} : memref<32x128xf32, #tpu.memory_space<vmem>>, vector<32x128xf32>,
    } else {
    }
    return
  }
  func.func @transform_0(%arg0: i32, %arg1: i32, %arg2: i32) -> (i32, i32) {
    %c0_i32 = arith.constant 0 : i32
    return %arg0, %arg2 : i32, i32
  }
  func.func @transform_1(%arg0: i32, %arg1: i32, %arg2: i32) -> (i32, i32, i32, i32) {
    %c0_i32 = arith.constant 0 : i32
    %c0_i32_0 = arith.constant 0 : i32
    %c0_i32_1 = arith.constant 0 : i32
    return %arg2, %arg1, %c0_i32, %c0_i32_0 : i32, i32, i32, i32
  }
  func.func @transform_2(%arg0: i32, %arg1: i32, %arg2: i32) -> (i32, i32) {
    %c0_i32 = arith.constant 0 : i32
    %c0_i32_0 = arith.constant 0 : i32
    return %c0_i32, %arg1 : i32, i32
  }
  func.func @transform_3(%arg0: i32, %arg1: i32, %arg2: i32) -> (i32, i32) {
    %c0_i32 = arith.constant 0 : i32
    return %arg0, %arg1 : i32, i32
  }
}

</mosaic_0001>

<llo_original>
// kernel: convnet_forward.2
$region0: #{convnet_forward.2}
  #allocation0 [shape = 'u32[]', space=smem, size = 0x4, offset = 0x4, fixed_abs, tag = 'smem constant byte address 0x4 - core index']
  #allocation1 [shape = 'u32[144,128]{1,0:T(1,128)}', space=vmem, size = 0x12000, scoped, tag = 'internal scratch']
  #allocation2 [shape = 'f32[128,128]{1,0:T(8,128)}', space=vmem, size = 0x10000, scoped, tag = 'scratch operand']
  %s0 = inlined_call_operand.vmem [shape: bf16[128,256], index: 0, kind: input, shape index: {}]
  %s1 = inlined_call_operand.vmem [shape: bf16[1,1,256,128], index: 1, kind: input, shape index: {}]
  %s2 = inlined_call_operand.vmem [shape: f32[1,128], index: 2, kind: input, shape index: {}]
  %s3 = inlined_call_operand.vmem [shape: bf16[64,128], index: 3, kind: output, shape index: {}]
  %s4 = sld [smem:[#allocation0]]
  $region34: #{convnet_forward.2} parent=0
    _
  %s6 = ssub.s32 1, %s4
  %s7 = scalar_select 0, %s6, %s4
  // Predicated region
  $region2: #{convnet_forward.2} parent=0 // pred_check
    _
  $region3: #{convnet_forward.2} parent=0 // pred_check_branch
    %9 = sbr.rel (0) target = $region5
  $region4: #{convnet_forward.2} parent=0 // pred_region
    _
  $region5: #{convnet_forward.2} parent=0 // pred_fallthru
    _
  // Predicated region
  $region6: #{convnet_forward.2} parent=0 // pred_check
    _
  $region7: #{convnet_forward.2} parent=0 // pred_check_branch
    %11 = sbr.rel (0) target = $region9
  $region8: #{convnet_forward.2} parent=0 // pred_region
    _
  $region9: #{convnet_forward.2} parent=0 // pred_fallthru
    _
  // Predicated region
  $region10: #{convnet_forward.2} parent=0 // pred_check
    _
  $region11: #{convnet_forward.2} parent=0 // pred_check_branch
    %13 = sbr.rel (0) target = $region13
  $region12: #{convnet_forward.2} parent=0 // pred_region
    _
  $region13: #{convnet_forward.2} parent=0 // pred_fallthru
    _
  %v15 = vld [vmem:[%s0] sm:$0xff]
  %v16 = vld [vmem:[%s0 + $0x8] sm:$0xff]
  %v17 = vld [vmem:[%s0 + $0x10] sm:$0xff]
  %v18 = vld [vmem:[%s0 + $0x18] sm:$0xff]
  %v19 = vld [vmem:[%s0 + $0x20] sm:$0xff]
  %v20 = vld [vmem:[%s0 + $0x28] sm:$0xff]
  %v21 = vld [vmem:[%s0 + $0x30] sm:$0xff]
  %v22 = vld [vmem:[%s0 + $0x38] sm:$0xff]
  %v23 = vld [vmem:[%s0 + $0x40] sm:$0xff]
  %v24 = vld [vmem:[%s0 + $0x48] sm:$0xff]
  %v25 = vld [vmem:[%s0 + $0x50] sm:$0xff]
  %v26 = vld [vmem:[%s0 + $0x58] sm:$0xff]
  %v27 = vld [vmem:[%s0 + $0x60] sm:$0xff]
  %v28 = vld [vmem:[%s0 + $0x68] sm:$0xff]
  %v29 = vld [vmem:[%s0 + $0x70] sm:$0xff]
  %v30 = vld [vmem:[%s0 + $0x78] sm:$0xff]
  %v31 = vld [vmem:[%s1] sm:$0xf]
  %v32 = vld [vmem:[%s1 + $0x4] sm:$0xf]
  %v33 = vld [vmem:[%s1 + $0x8] sm:$0xf]
  %v34 = vld [vmem:[%s1 + $0xc] sm:$0xf]
  %v35 = vld [vmem:[%s1 + $0x10] sm:$0xf]
  %v36 = vld [vmem:[%s1 + $0x14] sm:$0xf]
  %v37 = vld [vmem:[%s1 + $0x18] sm:$0xf]
  %v38 = vld [vmem:[%s1 + $0x1c] sm:$0xf]
  %v39 = vld [vmem:[%s1 + $0x20] sm:$0xf]
  %v40 = vld [vmem:[%s1 + $0x24] sm:$0xf]
  %v41 = vld [vmem:[%s1 + $0x28] sm:$0xf]
  %v42 = vld [vmem:[%s1 + $0x2c] sm:$0xf]
  %v43 = vld [vmem:[%s1 + $0x30] sm:$0xf]
  %v44 = vld [vmem:[%s1 + $0x34] sm:$0xf]
  %v45 = vld [vmem:[%s1 + $0x38] sm:$0xf]
  %v46 = vld [vmem:[%s1 + $0x3c] sm:$0xf]
  %v47 = vld [vmem:[%s1 + $0x40] sm:$0xf]
  %v48 = vld [vmem:[%s1 + $0x44] sm:$0xf]
  %v49 = vld [vmem:[%s1 + $0x48] sm:$0xf]
  %v50 = vld [vmem:[%s1 + $0x4c] sm:$0xf]
  %v51 = vld [vmem:[%s1 + $0x50] sm:$0xf]
  %v52 = vld [vmem:[%s1 + $0x54] sm:$0xf]
  %v53 = vld [vmem:[%s1 + $0x58] sm:$0xf]
  %v54 = vld [vmem:[%s1 + $0x5c] sm:$0xf]
  %v55 = vld [vmem:[%s1 + $0x60] sm:$0xf]
  %v56 = vld [vmem:[%s1 + $0x64] sm:$0xf]
  %v57 = vld [vmem:[%s1 + $0x68] sm:$0xf]
  %v58 = vld [vmem:[%s1 + $0x6c] sm:$0xf]
  %v59 = vld [vmem:[%s1 + $0x70] sm:$0xf]
  %v60 = vld [vmem:[%s1 + $0x74] sm:$0xf]
  %v61 = vld [vmem:[%s1 + $0x78] sm:$0xf]
  %v62 = vld [vmem:[%s1 + $0x7c] sm:$0xf]
  %v79 = vunpack.c.l.b16 %v15
  %v80 = vunpack.c.h.b16 %v15
  %v81 = vunpack.c.l.b16 %v16
  %v82 = vunpack.c.h.b16 %v16
  %v83 = vunpack.c.l.b16 %v17
  %v84 = vunpack.c.h.b16 %v17
  %v85 = vunpack.c.l.b16 %v18
  %v86 = vunpack.c.h.b16 %v18
  %v87 = vunpack.c.l.b16 %v19
  %v88 = vunpack.c.h.b16 %v19
  %v89 = vunpack.c.l.b16 %v20
  %v90 = vunpack.c.h.b16 %v20
  %v91 = vunpack.c.l.b16 %v21
  %v92 = vunpack.c.h.b16 %v21
  %v93 = vunpack.c.l.b16 %v22
  %v94 = vunpack.c.h.b16 %v22
  %v95 = vunpack.c.l.b16 %v23
  %v96 = vunpack.c.h.b16 %v23
  %v97 = vunpack.c.l.b16 %v24
  %v98 = vunpack.c.h.b16 %v24
  %v99 = vunpack.c.l.b16 %v25
  %v100 = vunpack.c.h.b16 %v25
  %v101 = vunpack.c.l.b16 %v26
  %v102 = vunpack.c.h.b16 %v26
  %v103 = vunpack.c.l.b16 %v27
  %v104 = vunpack.c.h.b16 %v27
  %v105 = vunpack.c.l.b16 %v28
  %v106 = vunpack.c.h.b16 %v28
  %v107 = vunpack.c.l.b16 %v29
  %v108 = vunpack.c.h.b16 %v29
  %v109 = vunpack.c.l.b16 %v30
  %v110 = vunpack.c.h.b16 %v30
  %v111 = vpack.c.b16 %v81, %v79
  %v112 = vpack.c.b16 %v82, %v80
  %v113 = vpack.c.b16 %v85, %v83
  %v114 = vpack.c.b16 %v86, %v84
  %v115 = vpack.c.b16 %v89, %v87
  %v116 = vpack.c.b16 %v90, %v88
  %v117 = vpack.c.b16 %v93, %v91
  %v118 = vpack.c.b16 %v94, %v92
  %v119 = vpack.c.b16 %v97, %v95
  %v120 = vpack.c.b16 %v98, %v96
  %v121 = vpack.c.b16 %v101, %v99
  %v122 = vpack.c.b16 %v102, %v100
  %v123 = vpack.c.b16 %v105, %v103
  %v124 = vpack.c.b16 %v106, %v104
  %v125 = vpack.c.b16 %v109, %v107
  %v126 = vpack.c.b16 %v110, %v108
  %v175 = vunpack.c.l.b16 %v31
  %v176 = vunpack.c.l.b16 %v32
  %v177 = vunpack.c.l.b16 %v33
  %v178 = vunpack.c.l.b16 %v34
  %v179 = vunpack.c.l.b16 %v35
  %v180 = vunpack.c.l.b16 %v36
  %v181 = vunpack.c.l.b16 %v37
  %v182 = vunpack.c.l.b16 %v38
  %v183 = vunpack.c.l.b16 %v39
  %v184 = vunpack.c.l.b16 %v40
  %v185 = vunpack.c.l.b16 %v41
  %v186 = vunpack.c.l.b16 %v42
  %v187 = vunpack.c.l.b16 %v43
  %v188 = vunpack.c.l.b16 %v44
  %v189 = vunpack.c.l.b16 %v45
  %v190 = vunpack.c.l.b16 %v46
  %v191 = vunpack.c.l.b16 %v47
  %v192 = vunpack.c.l.b16 %v48
  %v193 = vunpack.c.l.b16 %v49
  %v194 = vunpack.c.l.b16 %v50
  %v195 = vunpack.c.l.b16 %v51
  %v196 = vunpack.c.l.b16 %v52
  %v197 = vunpack.c.l.b16 %v53
  %v198 = vunpack.c.l.b16 %v54
  %v199 = vunpack.c.l.b16 %v55
  %v200 = vunpack.c.l.b16 %v56
  %v201 = vunpack.c.l.b16 %v57
  %v202 = vunpack.c.l.b16 %v58
  %v203 = vunpack.c.l.b16 %v59
  %v204 = vunpack.c.l.b16 %v60
  %v205 = vunpack.c.l.b16 %v61
  %v206 = vunpack.c.l.b16 %v62
  %v207 = vpack.c.b16 %v176, %v175
  %v208 = vpack.c.b16 %v178, %v177
  %v209 = vpack.c.b16 %v180, %v179
  %v210 = vpack.c.b16 %v182, %v181
  %v211 = vpack.c.b16 %v184, %v183
  %v212 = vpack.c.b16 %v186, %v185
  %v213 = vpack.c.b16 %v188, %v187
  %v214 = vpack.c.b16 %v190, %v189
  %v215 = vpack.c.b16 %v192, %v191
  %v216 = vpack.c.b16 %v194, %v193
  %v217 = vpack.c.b16 %v196, %v195
  %v218 = vpack.c.b16 %v198, %v197
  %v219 = vpack.c.b16 %v200, %v199
  %v220 = vpack.c.b16 %v202, %v201
  %v221 = vpack.c.b16 %v204, %v203
  %v222 = vpack.c.b16 %v206, %v205
  %239 = vmatprep.subr.bf16.mxu0 0
  %240 = vmatpush1.bf16.msra.mxu0 %v207
  %241 = vmatprep.subr.bf16.mxu0 0
  %242 = vmatpush1.bf16.msra.mxu0 %v208
  %243 = vmatprep.subr.bf16.mxu0 0
  %244 = vmatpush1.bf16.msra.mxu0 %v209
  %245 = vmatprep.subr.bf16.mxu0 0
  %246 = vmatpush1.bf16.msra.mxu0 %v210
  %247 = vmatprep.subr.bf16.mxu0 0
  %248 = vmatpush1.bf16.msra.mxu0 %v211
  %249 = vmatprep.subr.bf16.mxu0 0
  %250 = vmatpush1.bf16.msra.mxu0 %v212
  %251 = vmatprep.subr.bf16.mxu0 0
  %252 = vmatpush1.bf16.msra.mxu0 %v213
  %253 = vmatprep.subr.bf16.mxu0 0
  %254 = vmatpush1.bf16.msra.mxu0 %v214
  %255 = vmatprep.subr.bf16.mxu0 0
  %256 = vmatpush1.bf16.msra.mxu0 %v215
  %257 = vmatprep.subr.bf16.mxu0 0
  %258 = vmatpush1.bf16.msra.mxu0 %v216
  %259 = vmatprep.subr.bf16.mxu0 0
  %260 = vmatpush1.bf16.msra.mxu0 %v217
  %261 = vmatprep.subr.bf16.mxu0 0
  %262 = vmatpush1.bf16.msra.mxu0 %v218
  %263 = vmatprep.subr.bf16.mxu0 0
  %264 = vmatpush1.bf16.msra.mxu0 %v219
  %265 = vmatprep.subr.bf16.mxu0 0
  %266 = vmatpush1.bf16.msra.mxu0 %v220
  %267 = vmatprep.subr.bf16.mxu0 0
  %268 = vmatpush1.bf16.msra.mxu0 %v221
  %269 = vmatprep.subr.bf16.mxu0 0
  %270 = vmatpush1.bf16.msra.mxu0 %v222
  %271 = vmatprep.mubr.bf16.mxu0 %v112
  %272 = vmatmul.mubr.bf16.gmra.mrb[0].mxu0 %v111
  %v273 = vpop.f32.mrb[0].mxu0
  %v274 = vadd.f32 0.0, %v273
  %v275 = vpop.f32.mrb[0].mxu0
  %v276 = vpop.f32.mrb[0].mxu0
  %v277 = vadd.f32 0.0, %v276
  %v278 = vpop.f32.mrb[0].mxu0
  %279 = vmatprep.mubr.bf16.mxu0 %v114
  %280 = vmatmul.mubr.bf16.gmra.mrb[0].mxu0 %v113
  %v281 = vpop.f32.mrb[0].mxu0
  %v282 = vadd.f32 0.0, %v281
  %v283 = vpop.f32.mrb[0].mxu0
  %v284 = vpop.f32.mrb[0].mxu0
  %v285 = vadd.f32 0.0, %v284
  %v286 = vpop.f32.mrb[0].mxu0
  %287 = vmatprep.mubr.bf16.mxu0 %v116
  %288 = vmatmul.mubr.bf16.gmra.mrb[0].mxu0 %v115
  %v289 = vpop.f32.mrb[0].mxu0
  %v290 = vadd.f32 0.0, %v289
  %v291 = vpop.f32.mrb[0].mxu0
  %v292 = vpop.f32.mrb[0].mxu0
  %v293 = vadd.f32 0.0, %v292
  %v294 = vpop.f32.mrb[0].mxu0
  %295 = vmatprep.mubr.bf16.mxu0 %v118
  %296 = vmatmul.mubr.bf16.gmra.mrb[0].mxu0 %v117
  %v297 = vpop.f32.mrb[0].mxu0
  %v298 = vadd.f32 0.0, %v297
  %v299 = vpop.f32.mrb[0].mxu0
  %v300 = vpop.f32.mrb[0].mxu0
  %v301 = vadd.f32 0.0, %v300
  %v302 = vpop.f32.mrb[0].mxu0
  %303 = vmatprep.mubr.bf16.mxu0 %v120
  %304 = vmatmul.mubr.bf16.gmra.mrb[0].mxu0 %v119
  %v305 = vpop.f32.mrb[0].mxu0
  %v306 = vadd.f32 0.0, %v305
  %v307 = vpop.f32.mrb[0].mxu0
  %v308 = vpop.f32.mrb[0].mxu0
  %v309 = vadd.f32 0.0, %v308
  %v310 = vpop.f32.mrb[0].mxu0
  %311 = vmatprep.mubr.bf16.mxu0 %v122
  %312 = vmatmul.mubr.bf16.gmra.mrb[0].mxu0 %v121
  %v313 = vpop.f32.mrb[0].mxu0
  %v314 = vadd.f32 0.0, %v313
  %v315 = vpop.f32.mrb[0].mxu0
  %v316 = vpop.f32.mrb[0].mxu0
  %v317 = vadd.f32 0.0, %v316
  %v318 = vpop.f32.mrb[0].mxu0
  %319 = vmatprep.mubr.bf16.mxu0 %v124
  %320 = vmatmul.mubr.bf16.gmra.mrb[0].mxu0 %v123
  %v321 = vpop.f32.mrb[0].mxu0
  %v322 = vadd.f32 0.0, %v321
  %v323 = vpop.f32.mrb[0].mxu0
  %v324 = vpop.f32.mrb[0].mxu0
  %v325 = vadd.f32 0.0, %v324
  %v326 = vpop.f32.mrb[0].mxu0
  %327 = vmatprep.mubr.bf16.mxu0 %v126
  %328 = vmatmul.mubr.bf16.gmra.mrb[0].mxu0 %v125
  %v329 = vpop.f32.mrb[0].mxu0
  %v330 = vadd.f32 0.0, %v329
  %v331 = vpop.f32.mrb[0].mxu0
  %v332 = vpop.f32.mrb[0].mxu0
  %v333 = vadd.f32 0.0, %v332
  %v334 = vpop.f32.mrb[0].mxu0
  %335 = vdwg.mxu0
  %p336 = scmp.eq.s32.totalorder 0, 0
  // Predicated region
  $region14: #{convnet_forward.2} parent=0 // pred_check
    %p337 = pneg %p336
  $region15: #{convnet_forward.2} parent=0 // pred_check_branch
    %339 = sbr.rel (%p337) target = $region17
  $region16: #{convnet_forward.2} parent=0 // pred_region
    %340 = vst [vmem:[#allocation2] sm:$0xff] %v274
    %341 = vst [vmem:[#allocation2 + $0x8] sm:$0xff] %v277
    %342 = vst [vmem:[#allocation2 + $0x10] sm:$0xff] %v282
    %343 = vst [vmem:[#allocation2 + $0x18] sm:$0xff] %v285
    %344 = vst [vmem:[#allocation2 + $0x20] sm:$0xff] %v290
    %345 = vst [vmem:[#allocation2 + $0x28] sm:$0xff] %v293
    %346 = vst [vmem:[#allocation2 + $0x30] sm:$0xff] %v298
    %347 = vst [vmem:[#allocation2 + $0x38] sm:$0xff] %v301
    %348 = vst [vmem:[#allocation2 + $0x40] sm:$0xff] %v306
    %349 = vst [vmem:[#allocation2 + $0x48] sm:$0xff] %v309
    %350 = vst [vmem:[#allocation2 + $0x50] sm:$0xff] %v314
    %351 = vst [vmem:[#allocation2 + $0x58] sm:$0xff] %v317
    %352 = vst [vmem:[#allocation2 + $0x60] sm:$0xff] %v322
    %353 = vst [vmem:[#allocation2 + $0x68] sm:$0xff] %v325
    %354 = vst [vmem:[#allocation2 + $0x70] sm:$0xff] %v330
    %355 = vst [vmem:[#allocation2 + $0x78] sm:$0xff] %v333
  $region17: #{convnet_forward.2} parent=0 // pred_fallthru
    _
  %p356 = scmp.gt.s32.totalorder 0, 0
  // Predicated region
  $region18: #{convnet_forward.2} parent=0 // pred_check
    %p357 = pneg %p356
  $region19: #{convnet_forward.2} parent=0 // pred_check_branch
    %359 = sbr.rel (%p357) target = $region21
  $region20: #{convnet_forward.2} parent=0 // pred_region
    %v360 = vld [vmem:[#allocation2] sm:$0xff]
    %v361 = vld [vmem:[#allocation2 + $0x8] sm:$0xff]
    %v362 = vld [vmem:[#allocation2 + $0x10] sm:$0xff]
    %v363 = vld [vmem:[#allocation2 + $0x18] sm:$0xff]
    %v364 = vld [vmem:[#allocation2 + $0x20] sm:$0xff]
    %v365 = vld [vmem:[#allocation2 + $0x28] sm:$0xff]
    %v366 = vld [vmem:[#allocation2 + $0x30] sm:$0xff]
    %v367 = vld [vmem:[#allocation2 + $0x38] sm:$0xff]
    %v368 = vld [vmem:[#allocation2 + $0x40] sm:$0xff]
    %v369 = vld [vmem:[#allocation2 + $0x48] sm:$0xff]
    %v370 = vld [vmem:[#allocation2 + $0x50] sm:$0xff]
    %v371 = vld [vmem:[#allocation2 + $0x58] sm:$0xff]
    %v372 = vld [vmem:[#allocation2 + $0x60] sm:$0xff]
    %v373 = vld [vmem:[#allocation2 + $0x68] sm:$0xff]
    %v374 = vld [vmem:[#allocation2 + $0x70] sm:$0xff]
    %v375 = vld [vmem:[#allocation2 + $0x78] sm:$0xff]
    %v376 = vadd.f32 %v360, %v274
    %v377 = vadd.f32 %v361, %v277
    %v378 = vadd.f32 %v362, %v282
    %v379 = vadd.f32 %v363, %v285
    %v380 = vadd.f32 %v364, %v290
    %v381 = vadd.f32 %v365, %v293
    %v382 = vadd.f32 %v366, %v298
    %v383 = vadd.f32 %v367, %v301
    %v384 = vadd.f32 %v368, %v306
    %v385 = vadd.f32 %v369, %v309
    %v386 = vadd.f32 %v370, %v314
    %v387 = vadd.f32 %v371, %v317
    %v388 = vadd.f32 %v372, %v322
    %v389 = vadd.f32 %v373, %v325
    %v390 = vadd.f32 %v374, %v330
    %v391 = vadd.f32 %v375, %v333
    %392 = vst [vmem:[#allocation2] sm:$0xff] %v376
    %393 = vst [vmem:[#allocation2 + $0x8] sm:$0xff] %v377
    %394 = vst [vmem:[#allocation2 + $0x10] sm:$0xff] %v378
    %395 = vst [vmem:[#allocation2 + $0x18] sm:$0xff] %v379
    %396 = vst [vmem:[#allocation2 + $0x20] sm:$0xff] %v380
    %397 = vst [vmem:[#allocation2 + $0x28] sm:$0xff] %v381
    %398 = vst [vmem:[#allocation2 + $0x30] sm:$0xff] %v382
    %399 = vst [vmem:[#allocation2 + $0x38] sm:$0xff] %v383
    %400 = vst [vmem:[#allocation2 + $0x40] sm:$0xff] %v384
    %401 = vst [vmem:[#allocation2 + $0x48] sm:$0xff] %v385
    %402 = vst [vmem:[#allocation2 + $0x50] sm:$0xff] %v386
    %403 = vst [vmem:[#allocation2 + $0x58] sm:$0xff] %v387
    %404 = vst [vmem:[#allocation2 + $0x60] sm:$0xff] %v388
    %405 = vst [vmem:[#allocation2 + $0x68] sm:$0xff] %v389
    %406 = vst [vmem:[#allocation2 + $0x70] sm:$0xff] %v390
    %407 = vst [vmem:[#allocation2 + $0x78] sm:$0xff] %v391
  $region21: #{convnet_forward.2} parent=0 // pred_fallthru
    _
  // Predicated region
  $region22: #{convnet_forward.2} parent=0 // pred_check
    %p408 = pneg %p336
  $region23: #{convnet_forward.2} parent=0 // pred_check_branch
    %410 = sbr.rel (%p408) target = $region25
  $region24: #{convnet_forward.2} parent=0 // pred_region
    %v411 = vld [vmem:[#allocation2] sm:$0xff]
    %v412 = vld [vmem:[#allocation2 + $0x8] sm:$0xff]
    %v413 = vld [vmem:[#allocation2 + $0x10] sm:$0xff]
    %v414 = vld [vmem:[#allocation2 + $0x18] sm:$0xff]
    %v415 = vld [vmem:[#allocation2 + $0x20] sm:$0xff]
    %v416 = vld [vmem:[#allocation2 + $0x28] sm:$0xff]
    %v417 = vld [vmem:[#allocation2 + $0x30] sm:$0xff]
    %v418 = vld [vmem:[#allocation2 + $0x38] sm:$0xff]
    %v419 = vld [vmem:[#allocation2 + $0x40] sm:$0xff]
    %v420 = vld [vmem:[#allocation2 + $0x48] sm:$0xff]
    %v421 = vld [vmem:[#allocation2 + $0x50] sm:$0xff]
    %v422 = vld [vmem:[#allocation2 + $0x58] sm:$0xff]
    %v423 = vld [vmem:[#allocation2 + $0x60] sm:$0xff]
    %v424 = vld [vmem:[#allocation2 + $0x68] sm:$0xff]
    %v425 = vld [vmem:[#allocation2 + $0x70] sm:$0xff]
    %v426 = vld [vmem:[#allocation2 + $0x78] sm:$0xff]
    %v427 = vmax.f32 %v411, %v419
    %v428 = vmax.f32 %v412, %v420
    %v429 = vmax.f32 %v413, %v421
    %v430 = vmax.f32 %v414, %v422
    %v431 = vmax.f32 %v415, %v423
    %v432 = vmax.f32 %v416, %v424
    %v433 = vmax.f32 %v417, %v425
    %v434 = vmax.f32 %v418, %v426
    %v435 = vld [vmem:[%s2] sm:$0x1]
    %v437 = vlaneseq
    %v438 = vshrl.u32 %v437, 7
    %v439 = vsub.s32 0, %v438
    %v440 = vrot.slane %v435, %v439
    %v442 = vadd.f32 %v427, %v440
    %v443 = vadd.f32 %v428, %v440
    %v444 = vadd.f32 %v429, %v440
    %v445 = vadd.f32 %v430, %v440
    %v446 = vadd.f32 %v431, %v440
    %v447 = vadd.f32 %v432, %v440
    %v448 = vadd.f32 %v433, %v440
    %v449 = vadd.f32 %v434, %v440
    %v450 = vmax.f32 %v442, 0.0
    %v451 = vmax.f32 %v443, 0.0
    %v452 = vmax.f32 %v444, 0.0
    %v453 = vmax.f32 %v445, 0.0
    %v454 = vmax.f32 %v446, 0.0
    %v455 = vmax.f32 %v447, 0.0
    %v456 = vmax.f32 %v448, 0.0
    %v457 = vmax.f32 %v449, 0.0
    %v458 = vpack.c.bf16 %v451, %v450
    %v459 = vpack.c.bf16 %v453, %v452
    %v460 = vpack.c.bf16 %v455, %v454
    %v461 = vpack.c.bf16 %v457, %v456
    %v466 = vunpack.c.l.b16 %v458
    %v467 = vunpack.c.h.b16 %v458
    %v468 = vunpack.c.l.b16 %v459
    %v469 = vunpack.c.h.b16 %v459
    %v470 = vunpack.c.l.b16 %v460
    %v471 = vunpack.c.h.b16 %v460
    %v472 = vunpack.c.l.b16 %v461
    %v473 = vunpack.c.h.b16 %v461
    %v474 = vpack.c.b16 %v466, %v466
    %v475 = vpack.c.b16 %v467, %v467
    %v476 = vpack.c.b16 %v468, %v468
    %v477 = vpack.c.b16 %v469, %v469
    %v478 = vpack.c.b16 %v470, %v470
    %v479 = vpack.c.b16 %v471, %v471
    %v480 = vpack.c.b16 %v472, %v472
    %v481 = vpack.c.b16 %v473, %v473
    %490 = vst [vmem:[%s3] sm:$0xf] %v474
    %491 = vst [vmem:[%s3 + $0x4] sm:$0xf] %v475
    %492 = vst [vmem:[%s3 + $0x8] sm:$0xf] %v476
    %493 = vst [vmem:[%s3 + $0xc] sm:$0xf] %v477
    %494 = vst [vmem:[%s3 + $0x10] sm:$0xf] %v478
    %495 = vst [vmem:[%s3 + $0x14] sm:$0xf] %v479
    %496 = vst [vmem:[%s3 + $0x18] sm:$0xf] %v480
    %497 = vst [vmem:[%s3 + $0x1c] sm:$0xf] %v481
  $region25: #{convnet_forward.2} parent=0 // pred_fallthru
    _
  // Predicated region
  $region26: #{convnet_forward.2} parent=0 // pred_check
    _
  $region27: #{convnet_forward.2} parent=0 // pred_check_branch
    %499 = sbr.rel (0) target = $region29
  $region28: #{convnet_forward.2} parent=0 // pred_region
    _
  $region29: #{convnet_forward.2} parent=0 // pred_fallthru
    _
  // Predicated region
  $region30: #{convnet_forward.2} parent=0 // pred_check
    _
  $region31: #{convnet_forward.2} parent=0 // pred_check_branch
    %501 = sbr.rel (0) target = $region33
  $region32: #{convnet_forward.2} parent=0 // pred_region
    _
  $region33: #{convnet_forward.2} parent=0 // pred_fallthru
    _

// kernel: convnet_forward.3
$region0: #{convnet_forward.3}
  #allocation0 [shape = 'u32[]', space=smem, size = 0x4, offset = 0x4, fixed_abs, tag = 'smem constant byte address 0x4 - core index']
  #allocation1 [shape = 'u32[144,128]{1,0:T(1,128)}', space=vmem, size = 0x12000, scoped, tag = 'internal scratch']
  #allocation2 [shape = 'f32[64,128]{1,0:T(8,128)}', space=vmem, size = 0x8000, scoped, tag = 'scratch operand']
  %s0 = inlined_call_operand.vmem [shape: bf16[64,512], index: 0, kind: input, shape index: {}]
  %s1 = inlined_call_operand.vmem [shape: bf16[1,1,512,128], index: 1, kind: input, shape index: {}]
  %s2 = inlined_call_operand.vmem [shape: f32[1,128], index: 2, kind: input, shape index: {}]
  %s3 = inlined_call_operand.hbm [shape: f32[32,128], index: 3, kind: output, shape index: {}]
  %s4 = sld [smem:[#allocation0]]
  $region34: #{convnet_forward.3} parent=0
    _
  %s6 = ssub.s32 1, %s4
  %s7 = scalar_select 0, %s6, %s4
  $region1: #{convnet_forward.3} parent=0
    #allocation3 [shape = 'u8[16384]{0}', space=vmem, size = 0x4000, scoped, tag = 'output window, operand 0, single buffered']
    #allocation4 [shape = 's32[1]{0}', space=sflag, size = 0x4, scoped, tag = 'scoped memory for convnet_forward.3']
    %8 = vsyncpa [#allocation4], 0
    // Predicated region
    $region2: #{convnet_forward.3} parent=1 // pred_check
      _
    $region3: #{convnet_forward.3} parent=1 // pred_check_branch
      %10 = sbr.rel (0) target = $region5
    $region4: #{convnet_forward.3} parent=1 // pred_region
      _
    $region5: #{convnet_forward.3} parent=1 // pred_fallthru
      _
    // Predicated region
    $region6: #{convnet_forward.3} parent=1 // pred_check
      _
    $region7: #{convnet_forward.3} parent=1 // pred_check_branch
      %12 = sbr.rel (0) target = $region9
    $region8: #{convnet_forward.3} parent=1 // pred_region
      _
    $region9: #{convnet_forward.3} parent=1 // pred_fallthru
      _
    // Predicated region
    $region10: #{convnet_forward.3} parent=1 // pred_check
      _
    $region11: #{convnet_forward.3} parent=1 // pred_check_branch
      %14 = sbr.rel (0) target = $region13
    $region12: #{convnet_forward.3} parent=1 // pred_region
      _
    $region13: #{convnet_forward.3} parent=1 // pred_fallthru
      _
    %v16 = vld [vmem:[%s0] sm:$0xff]
    %v17 = vld [vmem:[%s0 + $0x8] sm:$0xff]
    %v18 = vld [vmem:[%s0 + $0x10] sm:$0xff]
    %v19 = vld [vmem:[%s0 + $0x18] sm:$0xff]
    %v20 = vld [vmem:[%s0 + $0x20] sm:$0xff]
    %v21 = vld [vmem:[%s0 + $0x28] sm:$0xff]
    %v22 = vld [vmem:[%s0 + $0x30] sm:$0xff]
    %v23 = vld [vmem:[%s0 + $0x38] sm:$0xff]
    %v24 = vld [vmem:[%s0 + $0x40] sm:$0xff]
    %v25 = vld [vmem:[%s0 + $0x48] sm:$0xff]
    %v26 = vld [vmem:[%s0 + $0x50] sm:$0xff]
    %v27 = vld [vmem:[%s0 + $0x58] sm:$0xff]
    %v28 = vld [vmem:[%s0 + $0x60] sm:$0xff]
    %v29 = vld [vmem:[%s0 + $0x68] sm:$0xff]
    %v30 = vld [vmem:[%s0 + $0x70] sm:$0xff]
    %v31 = vld [vmem:[%s0 + $0x78] sm:$0xff]
    %v32 = vld [vmem:[%s1] sm:$0xf]
    %v33 = vld [vmem:[%s1 + $0x4] sm:$0xf]
    %v34 = vld [vmem:[%s1 + $0x8] sm:$0xf]
    %v35 = vld [vmem:[%s1 + $0xc] sm:$0xf]
    %v36 = vld [vmem:[%s1 + $0x10] sm:$0xf]
    %v37 = vld [vmem:[%s1 + $0x14] sm:$0xf]
    %v38 = vld [vmem:[%s1 + $0x18] sm:$0xf]
    %v39 = vld [vmem:[%s1 + $0x1c] sm:$0xf]
    %v40 = vld [vmem:[%s1 + $0x20] sm:$0xf]
    %v41 = vld [vmem:[%s1 + $0x24] sm:$0xf]
    %v42 = vld [vmem:[%s1 + $0x28] sm:$0xf]
    %v43 = vld [vmem:[%s1 + $0x2c] sm:$0xf]
    %v44 = vld [vmem:[%s1 + $0x30] sm:$0xf]
    %v45 = vld [vmem:[%s1 + $0x34] sm:$0xf]
    %v46 = vld [vmem:[%s1 + $0x38] sm:$0xf]
    %v47 = vld [vmem:[%s1 + $0x3c] sm:$0xf]
    %v48 = vld [vmem:[%s1 + $0x40] sm:$0xf]
    %v49 = vld [vmem:[%s1 + $0x44] sm:$0xf]
    %v50 = vld [vmem:[%s1 + $0x48] sm:$0xf]
    %v51 = vld [vmem:[%s1 + $0x4c] sm:$0xf]
    %v52 = vld [vmem:[%s1 + $0x50] sm:$0xf]
    %v53 = vld [vmem:[%s1 + $0x54] sm:$0xf]
    %v54 = vld [vmem:[%s1 + $0x58] sm:$0xf]
    %v55 = vld [vmem:[%s1 + $0x5c] sm:$0xf]
    %v56 = vld [vmem:[%s1 + $0x60] sm:$0xf]
    %v57 = vld [vmem:[%s1 + $0x64] sm:$0xf]
    %v58 = vld [vmem:[%s1 + $0x68] sm:$0xf]
    %v59 = vld [vmem:[%s1 + $0x6c] sm:$0xf]
    %v60 = vld [vmem:[%s1 + $0x70] sm:$0xf]
    %v61 = vld [vmem:[%s1 + $0x74] sm:$0xf]
    %v62 = vld [vmem:[%s1 + $0x78] sm:$0xf]
    %v63 = vld [vmem:[%s1 + $0x7c] sm:$0xf]
    %v64 = vld [vmem:[%s1 + $0x80] sm:$0xf]
    %v65 = vld [vmem:[%s1 + $0x84] sm:$0xf]
    %v66 = vld [vmem:[%s1 + $0x88] sm:$0xf]
    %v67 = vld [vmem:[%s1 + $0x8c] sm:$0xf]
    %v68 = vld [vmem:[%s1 + $0x90] sm:$0xf]
    %v69 = vld [vmem:[%s1 + $0x94] sm:$0xf]
    %v70 = vld [vmem:[%s1 + $0x98] sm:$0xf]
    %v71 = vld [vmem:[%s1 + $0x9c] sm:$0xf]
    %v72 = vld [vmem:[%s1 + $0xa0] sm:$0xf]
    %v73 = vld [vmem:[%s1 + $0xa4] sm:$0xf]
    %v74 = vld [vmem:[%s1 + $0xa8] sm:$0xf]
    %v75 = vld [vmem:[%s1 + $0xac] sm:$0xf]
    %v76 = vld [vmem:[%s1 + $0xb0] sm:$0xf]
    %v77 = vld [vmem:[%s1 + $0xb4] sm:$0xf]
    %v78 = vld [vmem:[%s1 + $0xb8] sm:$0xf]
    %v79 = vld [vmem:[%s1 + $0xbc] sm:$0xf]
    %v80 = vld [vmem:[%s1 + $0xc0] sm:$0xf]
    %v81 = vld [vmem:[%s1 + $0xc4] sm:$0xf]
    %v82 = vld [vmem:[%s1 + $0xc8] sm:$0xf]
    %v83 = vld [vmem:[%s1 + $0xcc] sm:$0xf]
    %v84 = vld [vmem:[%s1 + $0xd0] sm:$0xf]
    %v85 = vld [vmem:[%s1 + $0xd4] sm:$0xf]
    %v86 = vld [vmem:[%s1 + $0xd8] sm:$0xf]
    %v87 = vld [vmem:[%s1 + $0xdc] sm:$0xf]
    %v88 = vld [vmem:[%s1 + $0xe0] sm:$0xf]
    %v89 = vld [vmem:[%s1 + $0xe4] sm:$0xf]
    %v90 = vld [vmem:[%s1 + $0xe8] sm:$0xf]
    %v91 = vld [vmem:[%s1 + $0xec] sm:$0xf]
    %v92 = vld [vmem:[%s1 + $0xf0] sm:$0xf]
    %v93 = vld [vmem:[%s1 + $0xf4] sm:$0xf]
    %v94 = vld [vmem:[%s1 + $0xf8] sm:$0xf]
    %v95 = vld [vmem:[%s1 + $0xfc] sm:$0xf]
    %v112 = vunpack.c.l.b16 %v16
    %v113 = vunpack.c.h.b16 %v16
    %v114 = vunpack.c.l.b16 %v17
    %v115 = vunpack.c.h.b16 %v17
    %v116 = vunpack.c.l.b16 %v18
    %v117 = vunpack.c.h.b16 %v18
    %v118 = vunpack.c.l.b16 %v19
    %v119 = vunpack.c.h.b16 %v19
    %v120 = vunpack.c.l.b16 %v20
    %v121 = vunpack.c.h.b16 %v20
    %v122 = vunpack.c.l.b16 %v21
    %v123 = vunpack.c.h.b16 %v21
    %v124 = vunpack.c.l.b16 %v22
    %v125 = vunpack.c.h.b16 %v22
    %v126 = vunpack.c.l.b16 %v23
    %v127 = vunpack.c.h.b16 %v23
    %v128 = vunpack.c.l.b16 %v24
    %v129 = vunpack.c.h.b16 %v24
    %v130 = vunpack.c.l.b16 %v25
    %v131 = vunpack.c.h.b16 %v25
    %v132 = vunpack.c.l.b16 %v26
    %v133 = vunpack.c.h.b16 %v26
    %v134 = vunpack.c.l.b16 %v27
    %v135 = vunpack.c.h.b16 %v27
    %v136 = vunpack.c.l.b16 %v28
    %v137 = vunpack.c.h.b16 %v28
    %v138 = vunpack.c.l.b16 %v29
    %v139 = vunpack.c.h.b16 %v29
    %v140 = vunpack.c.l.b16 %v30
    %v141 = vunpack.c.h.b16 %v30
    %v142 = vunpack.c.l.b16 %v31
    %v143 = vunpack.c.h.b16 %v31
    %v144 = vpack.c.b16 %v116, %v112
    %v145 = vpack.c.b16 %v117, %v113
    %v146 = vpack.c.b16 %v118, %v114
    %v147 = vpack.c.b16 %v119, %v115
    %v148 = vpack.c.b16 %v124, %v120
    %v149 = vpack.c.b16 %v125, %v121
    %v150 = vpack.c.b16 %v126, %v122
    %v151 = vpack.c.b16 %v127, %v123
    %v152 = vpack.c.b16 %v132, %v128
    %v153 = vpack.c.b16 %v133, %v129
    %v154 = vpack.c.b16 %v134, %v130
    %v155 = vpack.c.b16 %v135, %v131
    %v156 = vpack.c.b16 %v140, %v136
    %v157 = vpack.c.b16 %v141, %v137
    %v158 = vpack.c.b16 %v142, %v138
    %v159 = vpack.c.b16 %v143, %v139
    %v240 = vunpack.c.l.b16 %v32
    %v241 = vunpack.c.l.b16 %v33
    %v242 = vunpack.c.l.b16 %v34
    %v243 = vunpack.c.l.b16 %v35
    %v244 = vunpack.c.l.b16 %v36
    %v245 = vunpack.c.l.b16 %v37
    %v246 = vunpack.c.l.b16 %v38
    %v247 = vunpack.c.l.b16 %v39
    %v248 = vunpack.c.l.b16 %v40
    %v249 = vunpack.c.l.b16 %v41
    %v250 = vunpack.c.l.b16 %v42
    %v251 = vunpack.c.l.b16 %v43
    %v252 = vunpack.c.l.b16 %v44
    %v253 = vunpack.c.l.b16 %v45
    %v254 = vunpack.c.l.b16 %v46
    %v255 = vunpack.c.l.b16 %v47
    %v256 = vunpack.c.l.b16 %v48
    %v257 = vunpack.c.l.b16 %v49
    %v258 = vunpack.c.l.b16 %v50
    %v259 = vunpack.c.l.b16 %v51
    %v260 = vunpack.c.l.b16 %v52
    %v261 = vunpack.c.l.b16 %v53
    %v262 = vunpack.c.l.b16 %v54
    %v263 = vunpack.c.l.b16 %v55
    %v264 = vunpack.c.l.b16 %v56
    %v265 = vunpack.c.l.b16 %v57
    %v266 = vunpack.c.l.b16 %v58
    %v267 = vunpack.c.l.b16 %v59
    %v268 = vunpack.c.l.b16 %v60
    %v269 = vunpack.c.l.b16 %v61
    %v270 = vunpack.c.l.b16 %v62
    %v271 = vunpack.c.l.b16 %v63
    %v272 = vunpack.c.l.b16 %v64
    %v273 = vunpack.c.l.b16 %v65
    %v274 = vunpack.c.l.b16 %v66
    %v275 = vunpack.c.l.b16 %v67
    %v276 = vunpack.c.l.b16 %v68
    %v277 = vunpack.c.l.b16 %v69
    %v278 = vunpack.c.l.b16 %v70
    %v279 = vunpack.c.l.b16 %v71
    %v280 = vunpack.c.l.b16 %v72
    %v281 = vunpack.c.l.b16 %v73
    %v282 = vunpack.c.l.b16 %v74
    %v283 = vunpack.c.l.b16 %v75
    %v284 = vunpack.c.l.b16 %v76
    %v285 = vunpack.c.l.b16 %v77
    %v286 = vunpack.c.l.b16 %v78
    %v287 = vunpack.c.l.b16 %v79
    %v288 = vunpack.c.l.b16 %v80
    %v289 = vunpack.c.l.b16 %v81
    %v290 = vunpack.c.l.b16 %v82
    %v291 = vunpack.c.l.b16 %v83
    %v292 = vunpack.c.l.b16 %v84
    %v293 = vunpack.c.l.b16 %v85
    %v294 = vunpack.c.l.b16 %v86
    %v295 = vunpack.c.l.b16 %v87
    %v296 = vunpack.c.l.b16 %v88
    %v297 = vunpack.c.l.b16 %v89
    %v298 = vunpack.c.l.b16 %v90
    %v299 = vunpack.c.l.b16 %v91
    %v300 = vunpack.c.l.b16 %v92
    %v301 = vunpack.c.l.b16 %v93
    %v302 = vunpack.c.l.b16 %v94
    %v303 = vunpack.c.l.b16 %v95
    %v304 = vpack.c.b16 %v241, %v240
    %v305 = vpack.c.b16 %v243, %v242
    %v306 = vpack.c.b16 %v245, %v244
    %v307 = vpack.c.b16 %v247, %v246
    %v308 = vpack.c.b16 %v249, %v248
    %v309 = vpack.c.b16 %v251, %v250
    %v310 = vpack.c.b16 %v253, %v252
    %v311 = vpack.c.b16 %v255, %v254
    %v312 = vpack.c.b16 %v257, %v256
    %v313 = vpack.c.b16 %v259, %v258
    %v314 = vpack.c.b16 %v261, %v260
    %v315 = vpack.c.b16 %v263, %v262
    %v316 = vpack.c.b16 %v265, %v264
    %v317 = vpack.c.b16 %v267, %v266
    %v318 = vpack.c.b16 %v269, %v268
    %v319 = vpack.c.b16 %v271, %v270
    %v320 = vpack.c.b16 %v273, %v272
    %v321 = vpack.c.b16 %v275, %v274
    %v322 = vpack.c.b16 %v277, %v276
    %v323 = vpack.c.b16 %v279, %v278
    %v324 = vpack.c.b16 %v281, %v280
    %v325 = vpack.c.b16 %v283, %v282
    %v326 = vpack.c.b16 %v285, %v284
    %v327 = vpack.c.b16 %v287, %v286
    %v328 = vpack.c.b16 %v289, %v288
    %v329 = vpack.c.b16 %v291, %v290
    %v330 = vpack.c.b16 %v293, %v292
    %v331 = vpack.c.b16 %v295, %v294
    %v332 = vpack.c.b16 %v297, %v296
    %v333 = vpack.c.b16 %v299, %v298
    %v334 = vpack.c.b16 %v301, %v300
    %v335 = vpack.c.b16 %v303, %v302
    %368 = vmatprep.subr.bf16.mxu0 0
    %369 = vmatpush1.bf16.msra.mxu0 %v304
    %370 = vmatprep.subr.bf16.mxu0 0
    %371 = vmatpush1.bf16.msra.mxu0 %v305
    %372 = vmatprep.subr.bf16.mxu0 0
    %373 = vmatpush1.bf16.msra.mxu0 %v306
    %374 = vmatprep.subr.bf16.mxu0 0
    %375 = vmatpush1.bf16.msra.mxu0 %v307
    %376 = vmatprep.subr.bf16.mxu0 0
    %377 = vmatpush1.bf16.msra.mxu0 %v308
    %378 = vmatprep.subr.bf16.mxu0 0
    %379 = vmatpush1.bf16.msra.mxu0 %v309
    %380 = vmatprep.subr.bf16.mxu0 0
    %381 = vmatpush1.bf16.msra.mxu0 %v310
    %382 = vmatprep.subr.bf16.mxu0 0
    %383 = vmatpush1.bf16.msra.mxu0 %v311
    %384 = vmatprep.subr.bf16.mxu0 0
    %385 = vmatpush1.bf16.msra.mxu0 %v312
    %386 = vmatprep.subr.bf16.mxu0 0
    %387 = vmatpush1.bf16.msra.mxu0 %v313
    %388 = vmatprep.subr.bf16.mxu0 0
    %389 = vmatpush1.bf16.msra.mxu0 %v314
    %390 = vmatprep.subr.bf16.mxu0 0
    %391 = vmatpush1.bf16.msra.mxu0 %v315
    %392 = vmatprep.subr.bf16.mxu0 0
    %393 = vmatpush1.bf16.msra.mxu0 %v316
    %394 = vmatprep.subr.bf16.mxu0 0
    %395 = vmatpush1.bf16.msra.mxu0 %v317
    %396 = vmatprep.subr.bf16.mxu0 0
    %397 = vmatpush1.bf16.msra.mxu0 %v318
    %398 = vmatprep.subr.bf16.mxu0 0
    %399 = vmatpush1.bf16.msra.mxu0 %v319
    %400 = vmatprep.mubr.bf16.mxu0 %v145
    %401 = vmatmul.mubr.bf16.gmra.mrb[0].mxu0 %v144
    %v402 = vpop.f32.mrb[0].mxu0
    %v403 = vadd.f32 0.0, %v402
    %v404 = vpop.f32.mrb[0].mxu0
    %v405 = vpop.f32.mrb[0].mxu0
    %v406 = vadd.f32 0.0, %v405
    %v407 = vpop.f32.mrb[0].mxu0
    %408 = vmatprep.mubr.bf16.mxu0 %v149
    %409 = vmatmul.mubr.bf16.gmra.mrb[0].mxu0 %v148
    %v410 = vpop.f32.mrb[0].mxu0
    %v411 = vadd.f32 0.0, %v410
    %v412 = vpop.f32.mrb[0].mxu0
    %v413 = vpop.f32.mrb[0].mxu0
    %v414 = vadd.f32 0.0, %v413
    %v415 = vpop.f32.mrb[0].mxu0
    %416 = vmatprep.mubr.bf16.mxu0 %v153
    %417 = vmatmul.mubr.bf16.gmra.mrb[0].mxu0 %v152
    %v418 = vpop.f32.mrb[0].mxu0
    %v419 = vadd.f32 0.0, %v418
    %v420 = vpop.f32.mrb[0].mxu0
    %v421 = vpop.f32.mrb[0].mxu0
    %v422 = vadd.f32 0.0, %v421
    %v423 = vpop.f32.mrb[0].mxu0
    %424 = vmatprep.mubr.bf16.mxu0 %v157
    %425 = vmatmul.mubr.bf16.gmra.mrb[0].mxu0 %v156
    %v426 = vpop.f32.mrb[0].mxu0
    %v427 = vadd.f32 0.0, %v426
    %v428 = vpop.f32.mrb[0].mxu0
    %v429 = vpop.f32.mrb[0].mxu0
    %v430 = vadd.f32 0.0, %v429
    %v431 = vpop.f32.mrb[0].mxu0
    %432 = vdwg.mxu0
    %433 = vmatprep.subr.bf16.mxu0 0
    %434 = vmatpush1.bf16.msra.mxu0 %v320
    %435 = vmatprep.subr.bf16.mxu0 0
    %436 = vmatpush1.bf16.msra.mxu0 %v321
    %437 = vmatprep.subr.bf16.mxu0 0
    %438 = vmatpush1.bf16.msra.mxu0 %v322
    %439 = vmatprep.subr.bf16.mxu0 0
    %440 = vmatpush1.bf16.msra.mxu0 %v323
    %441 = vmatprep.subr.bf16.mxu0 0
    %442 = vmatpush1.bf16.msra.mxu0 %v324
    %443 = vmatprep.subr.bf16.mxu0 0
    %444 = vmatpush1.bf16.msra.mxu0 %v325
    %445 = vmatprep.subr.bf16.mxu0 0
    %446 = vmatpush1.bf16.msra.mxu0 %v326
    %447 = vmatprep.subr.bf16.mxu0 0
    %448 = vmatpush1.bf16.msra.mxu0 %v327
    %449 = vmatprep.subr.bf16.mxu0 0
    %450 = vmatpush1.bf16.msra.mxu0 %v328
    %451 = vmatprep.subr.bf16.mxu0 0
    %452 = vmatpush1.bf16.msra.mxu0 %v329
    %453 = vmatprep.subr.bf16.mxu0 0
    %454 = vmatpush1.bf16.msra.mxu0 %v330
    %455 = vmatprep.subr.bf16.mxu0 0
    %456 = vmatpush1.bf16.msra.mxu0 %v331
    %457 = vmatprep.subr.bf16.mxu0 0
    %458 = vmatpush1.bf16.msra.mxu0 %v332
    %459 = vmatprep.subr.bf16.mxu0 0
    %460 = vmatpush1.bf16.msra.mxu0 %v333
    %461 = vmatprep.subr.bf16.mxu0 0
    %462 = vmatpush1.bf16.msra.mxu0 %v334
    %463 = vmatprep.subr.bf16.mxu0 0
    %464 = vmatpush1.bf16.msra.mxu0 %v335
    %465 = vmatprep.mubr.bf16.mxu0 %v147
    %466 = vmatmul.mubr.bf16.gmra.mrb[0].mxu0 %v146
    %v467 = vpop.f32.mrb[0].mxu0
    %v468 = vadd.f32 %v403, %v467
    %v469 = vpop.f32.mrb[0].mxu0
    %v470 = vpop.f32.mrb[0].mxu0
    %v471 = vadd.f32 %v406, %v470
    %v472 = vpop.f32.mrb[0].mxu0
    %473 = vmatprep.mubr.bf16.mxu0 %v151
    %474 = vmatmul.mubr.bf16.gmra.mrb[0].mxu0 %v150
    %v475 = vpop.f32.mrb[0].mxu0
    %v476 = vadd.f32 %v411, %v475
    %v477 = vpop.f32.mrb[0].mxu0
    %v478 = vpop.f32.mrb[0].mxu0
    %v479 = vadd.f32 %v414, %v478
    %v480 = vpop.f32.mrb[0].mxu0
    %481 = vmatprep.mubr.bf16.mxu0 %v155
    %482 = vmatmul.mubr.bf16.gmra.mrb[0].mxu0 %v154
    %v483 = vpop.f32.mrb[0].mxu0
    %v484 = vadd.f32 %v419, %v483
    %v485 = vpop.f32.mrb[0].mxu0
    %v486 = vpop.f32.mrb[0].mxu0
    %v487 = vadd.f32 %v422, %v486
    %v488 = vpop.f32.mrb[0].mxu0
    %489 = vmatprep.mubr.bf16.mxu0 %v159
    %490 = vmatmul.mubr.bf16.gmra.mrb[0].mxu0 %v158
    %v491 = vpop.f32.mrb[0].mxu0
    %v492 = vadd.f32 %v427, %v491
    %v493 = vpop.f32.mrb[0].mxu0
    %v494 = vpop.f32.mrb[0].mxu0
    %v495 = vadd.f32 %v430, %v494
    %v496 = vpop.f32.mrb[0].mxu0
    %497 = vdwg.mxu0
    %p498 = scmp.eq.s32.totalorder 0, 0
    // Predicated region
    $region14: #{convnet_forward.3} parent=1 // pred_check
      %p499 = pneg %p498
    $region15: #{convnet_forward.3} parent=1 // pred_check_branch
      %501 = sbr.rel (%p499) target = $region17
    $region16: #{convnet_forward.3} parent=1 // pred_region
      %502 = vst [vmem:[#allocation2] sm:$0xff] %v468
      %503 = vst [vmem:[#allocation2 + $0x8] sm:$0xff] %v471
      %504 = vst [vmem:[#allocation2 + $0x10] sm:$0xff] %v476
      %505 = vst [vmem:[#allocation2 + $0x18] sm:$0xff] %v479
      %506 = vst [vmem:[#allocation2 + $0x20] sm:$0xff] %v484
      %507 = vst [vmem:[#allocation2 + $0x28] sm:$0xff] %v487
      %508 = vst [vmem:[#allocation2 + $0x30] sm:$0xff] %v492
      %509 = vst [vmem:[#allocation2 + $0x38] sm:$0xff] %v495
    $region17: #{convnet_forward.3} parent=1 // pred_fallthru
      _
    %p510 = scmp.gt.s32.totalorder 0, 0
    // Predicated region
    $region18: #{convnet_forward.3} parent=1 // pred_check
      %p511 = pneg %p510
    $region19: #{convnet_forward.3} parent=1 // pred_check_branch
      %513 = sbr.rel (%p511) target = $region21
    $region20: #{convnet_forward.3} parent=1 // pred_region
      %v514 = vld [vmem:[#allocation2] sm:$0xff]
      %v515 = vld [vmem:[#allocation2 + $0x8] sm:$0xff]
      %v516 = vld [vmem:[#allocation2 + $0x10] sm:$0xff]
      %v517 = vld [vmem:[#allocation2 + $0x18] sm:$0xff]
      %v518 = vld [vmem:[#allocation2 + $0x20] sm:$0xff]
      %v519 = vld [vmem:[#allocation2 + $0x28] sm:$0xff]
      %v520 = vld [vmem:[#allocation2 + $0x30] sm:$0xff]
      %v521 = vld [vmem:[#allocation2 + $0x38] sm:$0xff]
      %v522 = vadd.f32 %v514, %v468
      %v523 = vadd.f32 %v515, %v471
      %v524 = vadd.f32 %v516, %v476
      %v525 = vadd.f32 %v517, %v479
      %v526 = vadd.f32 %v518, %v484
      %v527 = vadd.f32 %v519, %v487
      %v528 = vadd.f32 %v520, %v492
      %v529 = vadd.f32 %v521, %v495
      %530 = vst [vmem:[#allocation2] sm:$0xff] %v522
      %531 = vst [vmem:[#allocation2 + $0x8] sm:$0xff] %v523
      %532 = vst [vmem:[#allocation2 + $0x10] sm:$0xff] %v524
      %533 = vst [vmem:[#allocation2 + $0x18] sm:$0xff] %v525
      %534 = vst [vmem:[#allocation2 + $0x20] sm:$0xff] %v526
      %535 = vst [vmem:[#allocation2 + $0x28] sm:$0xff] %v527
      %536 = vst [vmem:[#allocation2 + $0x30] sm:$0xff] %v528
      %537 = vst [vmem:[#allocation2 + $0x38] sm:$0xff] %v529
    $region21: #{convnet_forward.3} parent=1 // pred_fallthru
      _
    // Predicated region
    $region22: #{convnet_forward.3} parent=1 // pred_check
      %p538 = pneg %p498
    $region23: #{convnet_forward.3} parent=1 // pred_check_branch
      %540 = sbr.rel (%p538) target = $region25
    $region24: #{convnet_forward.3} parent=1 // pred_region
      %v541 = vld [vmem:[#allocation2] sm:$0xff]
      %v542 = vld [vmem:[#allocation2 + $0x8] sm:$0xff]
      %v543 = vld [vmem:[#allocation2 + $0x10] sm:$0xff]
      %v544 = vld [vmem:[#allocation2 + $0x18] sm:$0xff]
      %v545 = vld [vmem:[#allocation2 + $0x20] sm:$0xff]
      %v546 = vld [vmem:[#allocation2 + $0x28] sm:$0xff]
      %v547 = vld [vmem:[#allocation2 + $0x30] sm:$0xff]
      %v548 = vld [vmem:[#allocation2 + $0x38] sm:$0xff]
      %v549 = vmax.f32 %v541, %v545
      %v550 = vmax.f32 %v542, %v546
      %v551 = vmax.f32 %v543, %v547
      %v552 = vmax.f32 %v544, %v548
      %v553 = vld [vmem:[%s2] sm:$0x1]
      %v555 = vlaneseq
      %v556 = vshrl.u32 %v555, 7
      %v557 = vsub.s32 0, %v556
      %v558 = vrot.slane %v553, %v557
      %v560 = vadd.f32 %v549, %v558
      %v561 = vadd.f32 %v550, %v558
      %v562 = vadd.f32 %v551, %v558
      %v563 = vadd.f32 %v552, %v558
      %v564 = vmax.f32 %v560, 0.0
      %v565 = vmax.f32 %v561, 0.0
      %v566 = vmax.f32 %v562, 0.0
      %v567 = vmax.f32 %v563, 0.0
      %568 = vst [vmem:[#allocation3] sm:$0xff] %v564
      %569 = vst [vmem:[#allocation3 + $0x8] sm:$0xff] %v565
      %570 = vst [vmem:[#allocation3 + $0x10] sm:$0xff] %v566
      %571 = vst [vmem:[#allocation3 + $0x18] sm:$0xff] %v567
    $region25: #{convnet_forward.3} parent=1 // pred_fallthru
      _
    // Predicated region
    $region26: #{convnet_forward.3} parent=1 // pred_check
      _
    $region27: #{convnet_forward.3} parent=1 // pred_check_branch
      %573 = sbr.rel (0) target = $region29
    $region28: #{convnet_forward.3} parent=1 // pred_region
      %s575 = ssub.s32 512, 512
      %576 = vsyncadd [#allocation4], %s575
      %s577 = sshll.u32 [#allocation3], 4
      %s578 = int_to_ptr.vmem [resolvable:$true] %s577
      %583 = dma.vmem_to_hbm [thread:$0]  %s578, 512, %s3, [#allocation4], 128, 128, 8
    $region29: #{convnet_forward.3} parent=1 // pred_fallthru
      _
    // Predicated region
    $region30: #{convnet_forward.3} parent=1 // pred_check
      _
    $region31: #{convnet_forward.3} parent=1 // pred_check_branch
      %585 = sbr.rel (0) target = $region33
    $region32: #{convnet_forward.3} parent=1 // pred_region
      %586 = dma.done [#allocation4], 512
    $region33: #{convnet_forward.3} parent=1 // pred_fallthru
      _
    %587 = vsyncpa [#allocation4], 1

</llo_original>
